<compile_context>
chip_gen: v7x
topology: tpu7x:2x2x1
jax: 0.10.0
libtpu: 0.0.40
codegen_flags: <defaults>
</compile_context>

<pallas_src>
import numpy as np
import jax
import jax.numpy as jnp
from jax.experimental import pallas as pl
from jax.experimental.pallas import tpu as pltpu

_LANES = 128
# 1024 x 128 f32 block = 512 KiB; in+out, double-buffered -> ~2 MiB VMEM:
# comfortably inside the scoped VMEM budget on v5e / v6e / v7x while still
# amortizing the ~0.35 us per-grid-step overhead.
_MAX_BLOCK_ROWS = 1024


# ----------------------------------------------------------------------------
# Kernel body: plain tile copy (input block is aliased to the output buffer).
# ----------------------------------------------------------------------------
def _copy_kernel(x_ref, o_ref):
    o_ref[...] = x_ref[...]


def _identity_copy_tiled(x2d):
    """Lane-dense (rows, 128) copy, 1-D grid over rows, input aliased to output."""
    rows, cols = x2d.shape
    block_rows = rows if rows <= _MAX_BLOCK_ROWS else _MAX_BLOCK_ROWS
    grid = (pl.cdiv(rows, block_rows),)
    return pl.pallas_call(
        _copy_kernel,
        out_shape=jax.ShapeDtypeStruct(x2d.shape, x2d.dtype),
        grid=grid,
        in_specs=[pl.BlockSpec((block_rows, cols), lambda i: (i, 0))],
        out_specs=pl.BlockSpec((block_rows, cols), lambda i: (i, 0)),
        input_output_aliases={0: 0},
        compiler_params=pltpu.CompilerParams(
            dimension_semantics=("parallel",)),
    )(x2d)


def _identity_copy_whole(x):
    """Small / ragged fallback: single full-array VMEM block, aliased output."""
    return pl.pallas_call(
        _copy_kernel,
        out_shape=jax.ShapeDtypeStruct(x.shape, x.dtype),
        in_specs=[pl.BlockSpec(memory_space=pltpu.MemorySpace.VMEM)],
        out_specs=pl.BlockSpec(memory_space=pltpu.MemorySpace.VMEM),
        input_output_aliases={0: 0},
    )(x)


def identity_encoder_forward(obs, detach=False):
    """IdentityEncoder.forward: returns obs unchanged.

    NOTE: the strictly fastest implementation is simply `return obs` (zero
    FLOPs, zero HBM traffic).  The Pallas path below is retained only to keep a
    uniform encoder interface; it is the minimum-overhead kernel form: the
    output aliases the input buffer, the layout is lane-dense whenever the
    element count is a multiple of 128, and large inputs are tiled over a
    "parallel" grid so VMEM is never a limit.  `detach` is an autograd-only
    flag in the reference module and has no effect on the forward value.
    """
    del detach  # autograd-only; no forward effect
    n = obs.size
    if n == 0:
        return obs
    if n % _LANES == 0:
        rows = n // _LANES
        out2d = _identity_copy_tiled(obs.reshape(rows, _LANES))
        return out2d.reshape(obs.shape)
    # TODO(synk): huge ragged (non-multiple-of-128) inputs would want leading-axis
    # tiling; the encoder's (B, feature_dim) inputs are tiny so a single block is fine.
    return _identity_copy_whole(obs)


if __name__ == "__main__":
    # IdentityEncoder(obs_shape=(feature_dim,), ...) asserts len(obs_shape) == 1
    # and sets self.feature_dim = obs_shape[0].
    B = 2
    feature_dim = 32                      # obs_shape = (32,)

    key = jax.random.PRNGKey(0)
    obs = jax.random.normal(key, (B, feature_dim), jnp.float32)

    fwd = jax.jit(identity_encoder_forward)
    out = jax.block_until_ready(fwd(obs))
    assert out.shape == (B, feature_dim), out.shape
    # forward is exact identity — bit-for-bit equality expected.
    np.testing.assert_array_equal(np.asarray(out), np.asarray(obs))

    # Also exercise the lane-dense tiled path (element count multiple of 128).
    obs2 = jax.random.normal(jax.random.PRNGKey(0), (64, 256), jnp.float32)
    out2 = jax.block_until_ready(fwd(obs2))
    np.testing.assert_array_equal(np.asarray(out2), np.asarray(obs2))

    # TODO(synk): copy_conv_weights_from() and log() are host-side no-ops in the
    # reference module; nothing to kernelize.
    print("KERNEL_OK")
</pallas_src>

<mosaic_0001>
module attributes {stable_mosaic.version = 11 : i64} {
  func.func @_copy_kernel(%arg0: memref<2x32xf32, #tpu.memory_space<vmem>>, %arg1: memref<2x32xf32, #tpu.memory_space<vmem>>) attributes {dimension_semantics = [], scalar_prefetch = 0 : i64, scratch_operands = 0 : i64, tpu.core_type = #tpu.core_type<tc>} {
    %c0 = arith.constant 0 : index
    %c0_0 = arith.constant 0 : index
    %0 = vector.load %arg0[%c0, %c0_0] : memref<2x32xf32, #tpu.memory_space<vmem>>, vector<2x32xf32>
    %c0_1 = arith.constant 0 : index
    %c0_2 = arith.constant 0 : index
    %1 = vector.load %arg1[%c0_1, %c0_2] : memref<2x32xf32, #tpu.memory_space<vmem>>, vector<2x32xf32>
    tpu.vector_store %arg1[%c0_1, %c0_2], %0 {strides = array<i32>} : memref<2x32xf32, #tpu.memory_space<vmem>>, vector<2x32xf32>,
    return
  }
}

</mosaic_0001>

<llo_original>
// kernel: identity_encoder_forward.1
$region0: #{identity_encoder_forward.1}
  #allocation0 [shape = 'u32[]', space=smem, size = 0x4, offset = 0x4, fixed_abs, tag = 'smem constant byte address 0x4 - core index']
  #allocation1 [shape = 'u32[144,128]{1,0:T(1,128)}', space=vmem, size = 0x12000, scoped, tag = 'internal scratch']
  %s0 = inlined_call_operand.hbm [shape: f32[2,32], index: 0, kind: input, shape index: {}, may-alias: {0,1}]
  %s1 = inlined_call_operand.hbm [shape: f32[2,32], index: 1, kind: output, shape index: {}, may-alias: {0,1}]
  %s2 = sld [smem:[#allocation0]]
  $region18: #{identity_encoder_forward.1} parent=0
    _
  %s4 = ssub.s32 1, %s2
  %s5 = scalar_select 0, %s4, %s2
  $region1: #{identity_encoder_forward.1} parent=0
    #allocation2 [shape = 'u8[1024]{0}', space=vmem, size = 0x400, scoped, tag = 'input window, operand 0, single buffered']
    #allocation3 [shape = 's32[1]{0}', space=sflag, size = 0x4, scoped, tag = 'scoped memory for identity_encoder_forward.1']
    #allocation4 [shape = 's32[1]{0}', space=sflag, size = 0x4, scoped, tag = 'scoped memory for identity_encoder_forward.1']
    #allocation5 [shape = 'u8[1024]{0}', space=vmem, size = 0x400, scoped, tag = 'output window, operand 0, single buffered']
    %6 = vsyncpa [#allocation3], 0
    %7 = vsyncpa [#allocation4], 0
    // Predicated region
    $region2: #{identity_encoder_forward.1} parent=1 // pred_check
      _
    $region3: #{identity_encoder_forward.1} parent=1 // pred_check_branch
      %9 = sbr.rel (0) target = $region5
    $region4: #{identity_encoder_forward.1} parent=1 // pred_region
      %s11 = ssub.s32 32, 32
      %12 = vsyncadd [#allocation3], %s11
      %s14 = sshll.u32 [#allocation2], 4
      %s15 = int_to_ptr.vmem [resolvable:$true] %s14
      %17 = dma.hbm_to_vmem [thread:$0]  %s0, 32, %s15, [#allocation3]
    $region5: #{identity_encoder_forward.1} parent=1 // pred_fallthru
      _
    // Predicated region
    $region6: #{identity_encoder_forward.1} parent=1 // pred_check
      _
    $region7: #{identity_encoder_forward.1} parent=1 // pred_check_branch
      %19 = sbr.rel (0) target = $region9
    $region8: #{identity_encoder_forward.1} parent=1 // pred_region
      %20 = dma.done [#allocation3], 32
    $region9: #{identity_encoder_forward.1} parent=1 // pred_fallthru
      _
    %v21 = vld [vmem:[#allocation2] sm:$0x3]
    %vm22 = vcmask 254976
    %23 = vst.msk [vmem:[#allocation5] sm:$0x3] %vm22, %v21
    // Predicated region
    $region10: #{identity_encoder_forward.1} parent=1 // pred_check
      _
    $region11: #{identity_encoder_forward.1} parent=1 // pred_check_branch
      %25 = sbr.rel (0) target = $region13
    $region12: #{identity_encoder_forward.1} parent=1 // pred_region
      %s27 = ssub.s32 32, 32
      %28 = vsyncadd [#allocation4], %s27
      %s30 = sshll.u32 [#allocation5], 4
      %s31 = int_to_ptr.vmem [resolvable:$true] %s30
      %33 = dma.vmem_to_hbm [thread:$0]  %s31, 32, %s1, [#allocation4]
    $region13: #{identity_encoder_forward.1} parent=1 // pred_fallthru
      _
    // Predicated region
    $region14: #{identity_encoder_forward.1} parent=1 // pred_check
      _
    $region15: #{identity_encoder_forward.1} parent=1 // pred_check_branch
      %35 = sbr.rel (0) target = $region17
    $region16: #{identity_encoder_forward.1} parent=1 // pred_region
      %36 = dma.done [#allocation4], 32
    $region17: #{identity_encoder_forward.1} parent=1 // pred_fallthru
      _
    %37 = vsyncpa [#allocation3], 1
    %38 = vsyncpa [#allocation4], 1

</llo_original>
